<compile_context>
chip_gen: v7x
topology: tpu7x:2x2x1
jax: 0.10.0
libtpu: 0.0.40
codegen_flags: <defaults>
</compile_context>

<pallas_src>
import functools
import math

import jax
import jax.numpy as jnp
from jax.experimental import pallas as pl
from jax.experimental.pallas import tpu as pltpu

_MIN_GRID_STEPS = 8          # aim for >= this many programs (v7x has 2 TCs)
_TUNING = None               # (vmem_limit_bytes, target_block_bytes), lazy


def _round_up(v, m):
    return -(-v // m) * m


def _tuning():
    """Generation-aware VMEM limit and target block size."""
    global _TUNING
    if _TUNING is None:
        try:
            cap = int(pltpu.get_tpu_info().vmem_capacity_bytes)
        except Exception:  # conservative fallback if query unavailable
            cap = 64 << 20
        if cap >= (128 << 20):          # v5e / v6e: 128 MiB physical VMEM
            vmem_limit = 64 << 20
        else:                           # v7x: 64 MiB physical VMEM
            vmem_limit = 32 << 20
        _TUNING = (vmem_limit, vmem_limit // 16)   # ~4 MiB / ~2 MiB blocks
    return _TUNING


# ---------------------------------------------------------------------------
# tile pickers (dtype-aware, layout-padding-aware, no divisibility required)
# ---------------------------------------------------------------------------
def _pick_row_tile(rows, lane_width, itemsize, target_bytes):
    """Row tile for a (rows, lane_width) slab; multiple of 8 (or full extent)."""
    if rows <= 8:
        return max(rows, 1)
    bytes_per_row = _round_up(max(lane_width, 1), 128) * itemsize
    tr = max(8, (target_bytes // bytes_per_row) // 8 * 8)
    # Split across >= _MIN_GRID_STEPS programs when possible (megacore on v7x;
    # a few extra ~0.35us grid steps are free on 1-TC chips).
    for steps in (_MIN_GRID_STEPS, 4, 2):
        cap = (rows // steps) // 8 * 8
        if cap >= 8:
            tr = min(tr, cap)
            break
    return min(tr, rows)


def _pick_hw_tile(hw, c, itemsize, target_bytes, batch):
    """Lane (H*W) tile for a (1, C, hw) block; multiple of 128 (or full extent)."""
    if hw <= 128:
        return max(hw, 1)
    bytes_per_col = _round_up(max(c, 1), 8) * itemsize
    t = max(128, (target_bytes // bytes_per_col) // 128 * 128)
    want = max(1, -(-_MIN_GRID_STEPS // max(batch, 1)))
    for steps in (want, 4, 2):
        if steps < 2:
            continue
        cap = (hw // steps) // 128 * 128
        if cap >= 128:
            t = min(t, cap)
            break
    return min(t, hw)


# ---------------------------------------------------------------------------
# kernels
# ---------------------------------------------------------------------------
def _ln_rows_kernel(x_ref, w_ref, b_ref, o_ref, *, eps):
    """Normalize each row of a (TR, C) tile over its last (lane) axis."""
    x = x_ref[...].astype(jnp.float32)
    mu = jnp.mean(x, axis=-1, keepdims=True)
    xc = x - mu
    var = jnp.mean(xc * xc, axis=-1, keepdims=True)
    inv = jax.lax.rsqrt(var + eps)
    y = xc * inv * w_ref[...] + b_ref[...]
    o_ref[...] = y.astype(o_ref.dtype)


def _ln_packed_kernel(x_ref, w_ref, b_ref, m_ref, o_ref, *, inv_c, eps):
    """Lane-packed layernorm: each 128-wide row holds G independent C-wide
    segments.  Per-segment sums are computed with one MXU matmul against a
    (128,128) block-diagonal ones matrix, keeping loads/stores lane-dense."""
    x = x_ref[...].astype(jnp.float32)                       # (TR, 128)
    m = m_ref[...]                                           # (128, 128)
    mean = jnp.dot(x, m, preferred_element_type=jnp.float32) * inv_c
    xc = x - mean
    var = jnp.dot(xc * xc, m, preferred_element_type=jnp.float32) * inv_c
    inv = jax.lax.rsqrt(var + eps)
    y = xc * inv * w_ref[...] + b_ref[...]                   # w/b tiled to 128
    o_ref[...] = y.astype(o_ref.dtype)


def _ln_cf_kernel(x_ref, w_ref, b_ref, o_ref, *, eps):
    """channels_first: x block is (1, C, T_HW); reduce over the channel
    (sublane) axis while H*W stays on the 128-lane axis."""
    x = x_ref[...].astype(jnp.float32)                       # (1, C, T)
    mu = jnp.mean(x, axis=1, keepdims=True)
    xc = x - mu
    var = jnp.mean(xc * xc, axis=1, keepdims=True)
    inv = jax.lax.rsqrt(var + eps)
    y = xc * inv * w_ref[...] + b_ref[...]                   # w/b: (1, C, 1)
    o_ref[...] = y.astype(o_ref.dtype)


# ---------------------------------------------------------------------------
# pallas_call wrappers (always called from inside jit)
# ---------------------------------------------------------------------------
def _layernorm_rows(x2d, weight, bias, eps):
    rows, c = x2d.shape
    vmem_limit, target = _tuning()
    tr = _pick_row_tile(rows, c, x2d.dtype.itemsize, target)
    w2 = weight.astype(jnp.float32).reshape(1, c)
    b2 = bias.astype(jnp.float32).reshape(1, c)
    kernel = functools.partial(_ln_rows_kernel, eps=eps)
    return pl.pallas_call(
        kernel,
        out_shape=jax.ShapeDtypeStruct((rows, c), x2d.dtype),
        grid_spec=pltpu.PrefetchScalarGridSpec(
            num_scalar_prefetch=0,
            grid=(pl.cdiv(rows, tr),),
            in_specs=[
                pl.BlockSpec((tr, c), lambda i: (i, 0)),
                pl.BlockSpec((1, c), lambda i: (0, 0)),
                pl.BlockSpec((1, c), lambda i: (0, 0)),
            ],
            out_specs=pl.BlockSpec((tr, c), lambda i: (i, 0)),
        ),
        compiler_params=pltpu.CompilerParams(
            dimension_semantics=("parallel",),
            vmem_limit_bytes=vmem_limit,
        ),
    )(x2d, w2, b2)


def _layernorm_packed(x2d, weight, bias, eps, c, g):
    rows = x2d.shape[0]
    pad = (-rows) % g
    if pad:
        # A few (< g) dummy rows keep every load/store 128-lane dense; this is
        # far cheaper than dropping the whole tensor to a C-lane-wide kernel.
        x2d = jnp.pad(x2d, ((0, pad), (0, 0)))
    lane = g * c                                  # == 128
    p = x2d.shape[0] // g
    xp = x2d.reshape(p, lane)                     # free row-major reshape
    w_t = jnp.tile(weight.astype(jnp.float32), g).reshape(1, lane)
    b_t = jnp.tile(bias.astype(jnp.float32), g).reshape(1, lane)
    seg = jnp.arange(lane, dtype=jnp.int32) // c
    m_mat = (seg[:, None] == seg[None, :]).astype(jnp.float32)  # block-diag ones
    vmem_limit, target = _tuning()
    tr = _pick_row_tile(p, lane, x2d.dtype.itemsize, target)
    kernel = functools.partial(_ln_packed_kernel, inv_c=1.0 / c, eps=eps)
    yp = pl.pallas_call(
        kernel,
        out_shape=jax.ShapeDtypeStruct((p, lane), x2d.dtype),
        grid_spec=pltpu.PrefetchScalarGridSpec(
            num_scalar_prefetch=0,
            grid=(pl.cdiv(p, tr),),
            in_specs=[
                pl.BlockSpec((tr, lane), lambda i: (i, 0)),
                pl.BlockSpec((1, lane), lambda i: (0, 0)),
                pl.BlockSpec((1, lane), lambda i: (0, 0)),
                pl.BlockSpec((lane, lane), lambda i: (0, 0)),
            ],
            out_specs=pl.BlockSpec((tr, lane), lambda i: (i, 0)),
        ),
        compiler_params=pltpu.CompilerParams(
            dimension_semantics=("parallel",),
            vmem_limit_bytes=vmem_limit,
        ),
    )(xp, w_t, b_t, m_mat)
    y = yp.reshape(-1, c)
    if pad:
        y = y[:rows]
    return y


def _layernorm_cf(x3, weight, bias, eps):
    n, c, hw = x3.shape
    vmem_limit, target = _tuning()
    t = _pick_hw_tile(hw, c, x3.dtype.itemsize, target, n)
    w3 = weight.astype(jnp.float32).reshape(1, c, 1)
    b3 = bias.astype(jnp.float32).reshape(1, c, 1)
    kernel = functools.partial(_ln_cf_kernel, eps=eps)
    return pl.pallas_call(
        kernel,
        out_shape=jax.ShapeDtypeStruct((n, c, hw), x3.dtype),
        grid_spec=pltpu.PrefetchScalarGridSpec(
            num_scalar_prefetch=0,
            grid=(n, pl.cdiv(hw, t)),
            in_specs=[
                pl.BlockSpec((1, c, t), lambda i, j: (i, 0, j)),
                pl.BlockSpec((1, c, 1), lambda i, j: (0, 0, 0)),
                pl.BlockSpec((1, c, 1), lambda i, j: (0, 0, 0)),
            ],
            out_specs=pl.BlockSpec((1, c, t), lambda i, j: (i, 0, j)),
        ),
        compiler_params=pltpu.CompilerParams(
            dimension_semantics=("parallel", "parallel"),
            vmem_limit_bytes=vmem_limit,
        ),
    )(x3, w3, b3)


# ---------------------------------------------------------------------------
# jitted forward (reshapes / tiles / constants fold away under jit)
# ---------------------------------------------------------------------------
@functools.partial(jax.jit, static_argnames=("eps", "data_format", "c"))
def _layer_norm(x, weight, bias, *, eps, data_format, c):
    if data_format == "channels_last":
        lead = x.shape[:-1]
        x2d = x.reshape(-1, c)
        g = 128 // c if (c < 128 and 128 % c == 0) else 0
        if g > 1:
            y2d = _layernorm_packed(x2d, weight, bias, eps, c, g)
        else:
            y2d = _layernorm_rows(x2d, weight, bias, eps)
        return y2d.reshape(*lead, c)
    else:
        # channels_first: normalize over axis 1 directly in NCHW layout.
        n = x.shape[0]
        hw = int(math.prod(x.shape[2:])) if len(x.shape) > 2 else 1
        x3 = x.reshape(n, c, hw)
        y3 = _layernorm_cf(x3, weight, bias, eps)
        return y3.reshape(x.shape)


# ---------------------------------------------------------------------------
# module
# ---------------------------------------------------------------------------
class LayerNorm:
    """JAX/Pallas port of the PyTorch LayerNorm module (ConvNeXt style)."""

    def __init__(self, normalized_shape, eps=1e-6, data_format="channels_last"):
        if data_format not in ["channels_last", "channels_first"]:
            raise NotImplementedError
        self.weight = jnp.ones((normalized_shape,), dtype=jnp.float32)
        self.bias = jnp.zeros((normalized_shape,), dtype=jnp.float32)
        self.eps = float(eps)
        self.data_format = data_format
        self.normalized_shape = (normalized_shape,)

    def __call__(self, x):
        c = self.normalized_shape[0]
        if self.data_format == "channels_last":
            assert x.shape[-1] == c
        else:
            assert x.shape[1] == c
        return _layer_norm(x, self.weight, self.bias, eps=self.eps,
                           data_format=self.data_format, c=c)


# ---------------------------------------------------------------------------
# references + test
# ---------------------------------------------------------------------------
def _ref_channels_first(x, weight, bias, eps):
    x = x.astype(jnp.float32)
    u = jnp.mean(x, axis=1, keepdims=True)
    s = jnp.mean((x - u) ** 2, axis=1, keepdims=True)
    xn = (x - u) / jnp.sqrt(s + eps)
    return weight[None, :, None, None] * xn + bias[None, :, None, None]


def _ref_channels_last(x, weight, bias, eps):
    x = x.astype(jnp.float32)
    u = jnp.mean(x, axis=-1, keepdims=True)
    s = jnp.mean((x - u) ** 2, axis=-1, keepdims=True)
    xn = (x - u) / jnp.sqrt(s + eps)
    return xn * weight + bias


if __name__ == "__main__":
    key = jax.random.PRNGKey(0)
    k1, k2, k3, k4, k5 = jax.random.split(key, 5)
    eps = 1e-6
    C = 4

    # channels_first: NCHW, normalized in place over the channel/sublane axis.
    x_cf = jax.random.normal(k1, (2, C, 16, 16), dtype=jnp.float32)
    ln_cf = LayerNorm(C, eps=eps, data_format="channels_first")
    ln_cf.weight = jnp.linspace(0.5, 1.5, C, dtype=jnp.float32)
    ln_cf.bias = jnp.linspace(-0.2, 0.2, C, dtype=jnp.float32)
    y_cf = jax.block_until_ready(ln_cf(x_cf))
    ref_cf = _ref_channels_first(x_cf, ln_cf.weight, ln_cf.bias, eps)
    assert y_cf.shape == x_cf.shape
    assert jnp.allclose(y_cf, ref_cf, atol=1e-5, rtol=1e-5)

    # channels_last: NHWC with tiny C -> lane-packed (128-wide) path.
    x_cl = jax.random.normal(k2, (2, 16, 16, C), dtype=jnp.float32)
    ln_cl = LayerNorm(C, eps=eps, data_format="channels_last")
    ln_cl.weight = jnp.linspace(1.0, 2.0, C, dtype=jnp.float32)
    ln_cl.bias = jnp.linspace(0.1, -0.1, C, dtype=jnp.float32)
    y_cl = jax.block_until_ready(ln_cl(x_cl))
    ref_cl = _ref_channels_last(x_cl, ln_cl.weight, ln_cl.bias, eps)
    assert y_cl.shape == x_cl.shape
    assert jnp.allclose(y_cl, ref_cl, atol=1e-5, rtol=1e-5)

    # channels_last, rows not a multiple of G -> padded packed path (no cliff).
    x_odd = jax.random.normal(k3, (2, 5, 5, C), dtype=jnp.float32)
    y_odd = jax.block_until_ready(ln_cl(x_odd))
    ref_odd = _ref_channels_last(x_odd, ln_cl.weight, ln_cl.bias, eps)
    assert y_odd.shape == x_odd.shape
    assert jnp.allclose(y_odd, ref_odd, atol=1e-5, rtol=1e-5)

    # channels_last with C >= 128 -> plain lane-dense row kernel.
    C2 = 256
    x_big = jax.random.normal(k4, (2, 8, 8, C2), dtype=jnp.float32)
    ln_big = LayerNorm(C2, eps=eps, data_format="channels_last")
    ln_big.weight = jnp.linspace(0.9, 1.1, C2, dtype=jnp.float32)
    ln_big.bias = jnp.linspace(-0.05, 0.05, C2, dtype=jnp.float32)
    y_big = jax.block_until_ready(ln_big(x_big))
    ref_big = _ref_channels_last(x_big, ln_big.weight, ln_big.bias, eps)
    assert y_big.shape == x_big.shape
    assert jnp.allclose(y_big, ref_big, atol=1e-5, rtol=1e-5)

    # bf16 input through the packed path (f32 compute, bf16 store).
    x_bf = jax.random.normal(k5, (2, 8, 8, C), dtype=jnp.bfloat16)
    y_bf = jax.block_until_ready(ln_cl(x_bf))
    ref_bf = _ref_channels_last(x_bf, ln_cl.weight, ln_cl.bias, eps)
    assert y_bf.shape == x_bf.shape and y_bf.dtype == jnp.bfloat16
    assert jnp.allclose(y_bf.astype(jnp.float32), ref_bf, atol=3e-2, rtol=3e-2)

    print("KERNEL_OK")
</pallas_src>

<mosaic_0001>
module attributes {stable_mosaic.version = 11 : i64} {
  func.func @_ln_cf_kernel(%arg0: i32, %arg1: i32, %arg2: memref<1x4x128xf32, #tpu.memory_space<vmem>>, %arg3: memref<1x4x1xf32, #tpu.memory_space<vmem>>, %arg4: memref<1x4x1xf32, #tpu.memory_space<vmem>>, %arg5: memref<1x4x128xf32, #tpu.memory_space<vmem>>) attributes {dimension_semantics = [#tpu.dimension_semantics<parallel>, #tpu.dimension_semantics<parallel>], iteration_bounds = array<i64: 2, 2>, scalar_prefetch = 0 : i64, scratch_operands = 0 : i64, tpu.core_type = #tpu.core_type<tc>, window_params = [{transform_indices = @transform_0, window_bounds = array<i64: 1, 4, 128>}, {pipeline_mode = #tpu.pipeline_mode<synchronous>, transform_indices = @transform_1, window_bounds = array<i64: 1, 4, 1>}, {pipeline_mode = #tpu.pipeline_mode<synchronous>, transform_indices = @transform_2, window_bounds = array<i64: 1, 4, 1>}, {transform_indices = @transform_3, window_bounds = array<i64: 1, 4, 128>}]} {
    %c0 = arith.constant 0 : index
    %c0_0 = arith.constant 0 : index
    %c0_1 = arith.constant 0 : index
    %0 = vector.load %arg2[%c0, %c0_0, %c0_1] : memref<1x4x128xf32, #tpu.memory_space<vmem>>, vector<1x4x128xf32>
    %cst = arith.constant dense<0.000000e+00> : vector<1x128xf32>
    %1 = vector.multi_reduction <add>, %0, %cst [1] : vector<1x4x128xf32> to vector<1x128xf32>
    %2 = vector.shape_cast %1 : vector<1x128xf32> to vector<1x1x128xf32>
    %cst_2 = arith.constant 4.000000e+00 : f32
    %3 = vector.broadcast %cst_2 : f32 to vector<1x1x128xf32>
    %4 = arith.divf %2, %3 : vector<1x1x128xf32>
    %5 = vector.broadcast %4 : vector<1x1x128xf32> to vector<1x4x128xf32>
    %6 = arith.subf %0, %5 : vector<1x4x128xf32>
    %7 = arith.mulf %6, %6 : vector<1x4x128xf32>
    %cst_3 = arith.constant dense<0.000000e+00> : vector<1x128xf32>
    %8 = vector.multi_reduction <add>, %7, %cst_3 [1] : vector<1x4x128xf32> to vector<1x128xf32>
    %9 = vector.shape_cast %8 : vector<1x128xf32> to vector<1x1x128xf32>
    %cst_4 = arith.constant 4.000000e+00 : f32
    %10 = vector.broadcast %cst_4 : f32 to vector<1x1x128xf32>
    %11 = arith.divf %9, %10 : vector<1x1x128xf32>
    %cst_5 = arith.constant 9.99999997E-7 : f32
    %12 = vector.broadcast %cst_5 : f32 to vector<1x1x128xf32>
    %13 = arith.addf %11, %12 : vector<1x1x128xf32>
    %14 = math.rsqrt %13 : vector<1x1x128xf32>
    %15 = vector.broadcast %14 : vector<1x1x128xf32> to vector<1x4x128xf32>
    %16 = arith.mulf %6, %15 : vector<1x4x128xf32>
    %c0_6 = arith.constant 0 : index
    %c0_7 = arith.constant 0 : index
    %c0_8 = arith.constant 0 : index
    %17 = vector.load %arg3[%c0_6, %c0_7, %c0_8] : memref<1x4x1xf32, #tpu.memory_space<vmem>>, vector<1x4x1xf32>
    %18 = vector.broadcast %17 : vector<1x4x1xf32> to vector<1x4x128xf32>
    %19 = arith.mulf %16, %18 : vector<1x4x128xf32>
    %c0_9 = arith.constant 0 : index
    %c0_10 = arith.constant 0 : index
    %c0_11 = arith.constant 0 : index
    %20 = vector.load %arg4[%c0_9, %c0_10, %c0_11] : memref<1x4x1xf32, #tpu.memory_space<vmem>>, vector<1x4x1xf32>
    %21 = vector.broadcast %20 : vector<1x4x1xf32> to vector<1x4x128xf32>
    %22 = arith.addf %19, %21 : vector<1x4x128xf32>
    %c0_12 = arith.constant 0 : index
    %c0_13 = arith.constant 0 : index
    %c0_14 = arith.constant 0 : index
    %23 = vector.load %arg5[%c0_12, %c0_13, %c0_14] : memref<1x4x128xf32, #tpu.memory_space<vmem>>, vector<1x4x128xf32>
    tpu.vector_store %arg5[%c0_12, %c0_13, %c0_14], %22 {strides = array<i32>} : memref<1x4x128xf32, #tpu.memory_space<vmem>>, vector<1x4x128xf32>,
    return
  }
  func.func @transform_0(%arg0: i32, %arg1: i32) -> (i32, i32, i32) {
    %c0_i32 = arith.constant 0 : i32
    %c0_i32_0 = arith.constant 0 : i32
    return %arg0, %c0_i32, %arg1 : i32, i32, i32
  }
  func.func @transform_1(%arg0: i32, %arg1: i32) -> (i32, i32, i32) {
    %c0_i32 = arith.constant 0 : i32
    %c0_i32_0 = arith.constant 0 : i32
    %c0_i32_1 = arith.constant 0 : i32
    %c0_i32_2 = arith.constant 0 : i32
    return %c0_i32, %c0_i32_0, %c0_i32_1 : i32, i32, i32
  }
  func.func @transform_2(%arg0: i32, %arg1: i32) -> (i32, i32, i32) {
    %c0_i32 = arith.constant 0 : i32
    %c0_i32_0 = arith.constant 0 : i32
    %c0_i32_1 = arith.constant 0 : i32
    %c0_i32_2 = arith.constant 0 : i32
    return %c0_i32, %c0_i32_0, %c0_i32_1 : i32, i32, i32
  }
  func.func @transform_3(%arg0: i32, %arg1: i32) -> (i32, i32, i32) {
    %c0_i32 = arith.constant 0 : i32
    %c0_i32_0 = arith.constant 0 : i32
    return %arg0, %c0_i32, %arg1 : i32, i32, i32
  }
}

</mosaic_0001>

<llo_original>
// kernel: _layer_norm.1
$region0: #{_layer_norm.1}
  #allocation0 [shape = 'u32[]', space=smem, size = 0x4, offset = 0x4, fixed_abs, tag = 'smem constant byte address 0x4 - core index']
  #allocation1 [shape = 'u32[144,128]{1,0:T(1,128)}', space=vmem, size = 0x12000, scoped, tag = 'internal scratch']
  %s0 = inlined_call_operand.vmem [shape: f32[2,4,256], index: 0, kind: input, shape index: {}]
  %s1 = inlined_call_operand.vmem [shape: f32[1,4,1], index: 1, kind: input, shape index: {}]
  %s2 = inlined_call_operand.vmem [shape: f32[1,4,1], index: 2, kind: input, shape index: {}]
  %s3 = inlined_call_operand.vmem [shape: f32[2,4,256], index: 3, kind: output, shape index: {}]
  %s4 = sld [smem:[#allocation0]]
  $region45: #{_layer_norm.1} parent=0
    _
  %s6 = ssub.s32 1, %s4
  %s7 = scalar_select 0, %s6, %s4
  loop: start=0, step=1, limit=6
  $region2: #{_layer_norm.1} parent=0 // loop_pre_header
    _
  $region3: #{_layer_norm.1} parent=0 // loop_header
    %s9 = sphi 0, %s13
    %p10 = scmp.ge.s32.totalorder %s9, 6
    %s16 = sphi 0, %s28
    %s17 = sphi 0, %s24
    %s18 = sphi 0, %s16
    %s19 = sphi 0, %s17
    %s20 = sphi 0, %s18
    %s21 = sphi 0, %s19
    %s33 = sphi 0, %s35
    %s36 = sphi 0, %s33
    %s37 = sphi 0, %s36
    %s53 = sphi 0, %s37
    %s57 = sphi 0, %s57
    %s59 = sphi 0, %s57
    %s60 = sphi 0, %s59
    %s74 = sphi 0, %s60
    %s78 = sphi 0, %s78
    %s80 = sphi 0, %s78
    %s81 = sphi 0, %s80
    %s95 = sphi 0, %s81
    %s103 = sphi 0, %s105
    %s106 = sphi 0, %s103
    %s107 = sphi 0, %s106
    %s123 = sphi 0, %s107
  $region4: #{_layer_norm.1} parent=0 // loop_header_branch
    %12 = sbr.rel (%p10) target = $region8
  $region5: #{_layer_norm.1} parent=0 // loop_body
    %s14 = ssub.s32 %s9, 1
    %s15 = ssub.s32 %s9, 2
    %s22 = sadd.s32 1, %s17
    %p23 = scmp.ge.s32.totalorder %s22, 2
    %s24 = scalar_select %p23, 0, %s22
    %s25 = sadd.s32 1, %s16
    %s26 = scalar_select %p23, %s25, %s16
    %p27 = scmp.ge.s32.totalorder %s26, 2
    %s28 = scalar_select %p27, 0, %s26
    %s29 = ssub.s32 %s16, %s28
    %s30 = ssub.s32 %s17, %s24
    %s31 = sor.u32 %s29, %s30
    %p32 = scmp.eq.s32.totalorder %s31, 0
    %s34 = sadd.s32 %s33, 1
    %s35 = scalar_select %p32, %s33, %s34
    %p38 = pneg %p32
    %p39 = scmp.eq.s32.totalorder %s9, 3
    %p40 = por %p38, %p39
    %p41 = scmp.ne.s32.totalorder %s33, %s36
    %p42 = scmp.eq.s32.totalorder %s9, 0
    %p43 = por %p41, %p42
    %p44 = scmp.ne.s32.totalorder %s33, %s36
    %p45 = scmp.eq.s32.totalorder %s14, 3
    %p46 = por %p44, %p45
    %p47 = scmp.ne.s32.totalorder %s36, %s37
    %p48 = scmp.eq.s32.totalorder %s14, 0
    %p49 = por %p47, %p48
    %p50 = scmp.ne.s32.totalorder %s36, %s37
    %p51 = scmp.eq.s32.totalorder %s15, 3
    %p52 = por %p50, %p51
    %p54 = scmp.ne.s32.totalorder %s37, %s53
    %p55 = scmp.eq.s32.totalorder %s15, 0
    %p56 = por %p54, %p55
    %s58 = sadd.s32 %s57, 1
    %p61 = scmp.eq.s32.totalorder %s9, 3
    %p62 = scmp.ne.s32.totalorder %s57, %s59
    %p63 = scmp.eq.s32.totalorder %s9, 0
    %p64 = por %p62, %p63
    %p65 = scmp.ne.s32.totalorder %s57, %s59
    %p66 = scmp.eq.s32.totalorder %s14, 3
    %p67 = por %p65, %p66
    %p68 = scmp.ne.s32.totalorder %s59, %s60
    %p69 = scmp.eq.s32.totalorder %s14, 0
    %p70 = por %p68, %p69
    %p71 = scmp.ne.s32.totalorder %s59, %s60
    %p72 = scmp.eq.s32.totalorder %s15, 3
    %p73 = por %p71, %p72
    %p75 = scmp.ne.s32.totalorder %s60, %s74
    %p76 = scmp.eq.s32.totalorder %s15, 0
    %p77 = por %p75, %p76
    %s79 = sadd.s32 %s78, 1
    %p82 = scmp.eq.s32.totalorder %s9, 3
    %p83 = scmp.ne.s32.totalorder %s78, %s80
    %p84 = scmp.eq.s32.totalorder %s9, 0
    %p85 = por %p83, %p84
    %p86 = scmp.ne.s32.totalorder %s78, %s80
    %p87 = scmp.eq.s32.totalorder %s14, 3
    %p88 = por %p86, %p87
    %p89 = scmp.ne.s32.totalorder %s80, %s81
    %p90 = scmp.eq.s32.totalorder %s14, 0
    %p91 = por %p89, %p90
    %p92 = scmp.ne.s32.totalorder %s80, %s81
    %p93 = scmp.eq.s32.totalorder %s15, 3
    %p94 = por %p92, %p93
    %p96 = scmp.ne.s32.totalorder %s81, %s95
    %p97 = scmp.eq.s32.totalorder %s15, 0
    %p98 = por %p96, %p97
    %s99 = ssub.s32 %s16, %s28
    %s100 = ssub.s32 %s17, %s24
    %s101 = sor.u32 %s99, %s100
    %p102 = scmp.eq.s32.totalorder %s101, 0
    %s104 = sadd.s32 %s103, 1
    %s105 = scalar_select %p102, %s103, %s104
    %p108 = pneg %p102
    %p109 = scmp.eq.s32.totalorder %s9, 3
    %p110 = por %p108, %p109
    %p111 = scmp.ne.s32.totalorder %s103, %s106
    %p112 = scmp.eq.s32.totalorder %s9, 0
    %p113 = por %p111, %p112
    %p114 = scmp.ne.s32.totalorder %s103, %s106
    %p115 = scmp.eq.s32.totalorder %s14, 3
    %p116 = por %p114, %p115
    %p117 = scmp.ne.s32.totalorder %s106, %s107
    %p118 = scmp.eq.s32.totalorder %s14, 0
    %p119 = por %p117, %p118
    %p120 = scmp.ne.s32.totalorder %s106, %s107
    %p121 = scmp.eq.s32.totalorder %s15, 3
    %p122 = por %p120, %p121
    %p124 = scmp.ne.s32.totalorder %s107, %s123
    %p125 = scmp.eq.s32.totalorder %s15, 0
    %p126 = por %p124, %p125
    %p127 = scmp.le.s32.totalorder 1, %s9
    %p128 = scmp.lt.s32.totalorder %s9, 5
    %p129 = pnand %p127, %p128
    %p130 = pneg %p129
    // Predicated region
    $region9: #{_layer_norm.1} parent=5 // pred_check
      _
    $region10: #{_layer_norm.1} parent=5 // pred_check_branch
      %132 = sbr.rel (%p129) target = $region12
    $region11: #{_layer_norm.1} parent=5 // pred_region
      %s133 = ssub.s32 %s9, 1
      // Predicated region
      $region13: #{_layer_norm.1} parent=11 // pred_check
        %p134 = pneg %p70
      $region14: #{_layer_norm.1} parent=11 // pred_check_branch
        %136 = sbr.rel (%p134) target = $region16
      $region15: #{_layer_norm.1} parent=11 // pred_region
        _
      $region16: #{_layer_norm.1} parent=11 // pred_fallthru
        _
      // Predicated region
      $region17: #{_layer_norm.1} parent=11 // pred_check
        %p137 = pneg %p91
      $region18: #{_layer_norm.1} parent=11 // pred_check_branch
        %139 = sbr.rel (%p137) target = $region20
      $region19: #{_layer_norm.1} parent=11 // pred_region
        _
      $region20: #{_layer_norm.1} parent=11 // pred_fallthru
        _
    $region12: #{_layer_norm.1} parent=5 // pred_fallthru
      _
    %p140 = scmp.lt.s32.totalorder %s9, 4
    // Predicated region
    $region21: #{_layer_norm.1} parent=5 // pred_check
      %p141 = pneg %p140
    $region22: #{_layer_norm.1} parent=5 // pred_check_branch
      %143 = sbr.rel (%p141) target = $region24
    $region23: #{_layer_norm.1} parent=5 // pred_region
      // Predicated region
      $region25: #{_layer_norm.1} parent=23 // pred_check
        %p144 = pneg %p43
      $region26: #{_layer_norm.1} parent=23 // pred_check_branch
        %146 = sbr.rel (%p144) target = $region28
      $region27: #{_layer_norm.1} parent=23 // pred_region
        %p147 = scmp.lt.s32.totalorder %s16, 1
        %s148 = scalar_select %p147, %s16, 1
        %p149 = scmp.lt.s32.totalorder %s17, 1
        %s150 = scalar_select %p149, %s17, 1
        %s151 = smul.addr %s148, 2
        %s152 = sadd.s32 %s150, %s151
        %s153 = smul.addr %s152, 4
        %s154 = scalar_lea.vmem %s0, %s153
      $region28: #{_layer_norm.1} parent=23 // pred_fallthru
        _
    $region24: #{_layer_norm.1} parent=5 // pred_fallthru
      _
    %p155 = scmp.le.s32.totalorder 1, %s9
    %p156 = scmp.lt.s32.totalorder %s9, 5
    %p157 = pnand %p155, %p156
    %p158 = pneg %p157
    // Predicated region
    $region29: #{_layer_norm.1} parent=5 // pred_check
      _
    $region30: #{_layer_norm.1} parent=5 // pred_check_branch
      %160 = sbr.rel (%p157) target = $region32
    $region31: #{_layer_norm.1} parent=5 // pred_region
      %s161 = ssub.s32 %s9, 1
      %p162 = scmp.lt.s32.totalorder %s18, 1
      %s163 = scalar_select %p162, %s18, 1
      %p164 = scmp.lt.s32.totalorder %s19, 1
      %s165 = scalar_select %p164, %s19, 1
      %s166 = smul.addr %s163, 2
      %s167 = sadd.s32 %s165, %s166
      %s168 = smul.addr %s167, 4
      %s169 = scalar_lea.vmem %s0, %s168
      %p170 = pneg %p49
      %p171 = pneg %p46
      %p172 = pneg %p70
      %p173 = pneg %p67
      %p174 = pneg %p91
      %p175 = pneg %p88
      %p176 = pneg %p119
      %p177 = pneg %p116
      %p178 = scmp.lt.s32.totalorder %s18, 1
      %s179 = scalar_select %p178, %s18, 1
      %p180 = scmp.lt.s32.totalorder %s19, 1
      %s181 = scalar_select %p180, %s19, 1
      %s182 = smul.addr %s179, 2
      %s183 = sadd.s32 %s181, %s182
      %s184 = smul.addr %s183, 4
      %s185 = scalar_lea.vmem %s3, %s184
      %p186 = scmp.lt.s32.totalorder %s18, 1
      %s187 = scalar_select %p186, %s18, 1
      %p188 = scmp.lt.s32.totalorder %s19, 1
      %s189 = scalar_select %p188, %s19, 1
      %s190 = smul.addr %s187, 2
      %s191 = sadd.s32 %s189, %s190
      %s192 = smul.addr %s191, 4
      %s193 = scalar_lea.vmem %s0, %s192
      %p194 = scmp.lt.s32.totalorder %s18, 1
      %s195 = scalar_select %p194, %s18, 1
      %p196 = scmp.lt.s32.totalorder %s19, 1
      %s197 = scalar_select %p196, %s19, 1
      %s198 = smul.addr %s195, 2
      %s199 = sadd.s32 %s197, %s198
      %s200 = smul.addr %s199, 4
      %s201 = scalar_lea.vmem %s3, %s200
      %v202 = vld [vmem:[%s193] sm:$0xf]
      %vm203 = vcmask 1043456
      %v204 = vsel %vm203, %v202, 0.0
      %v205 = vrot.slane %v204, 4
      %v206 = vadd.f32 %v204, %v205
      %v207 = vrot.slane %v206, 2
      %v208 = vadd.f32 %v206, %v207
      %v209 = vrot.slane %v208, 1
      %v210 = vadd.f32 %v208, %v209
      %v211 = vrcp.pop 4.0
      %v212 = vmul.f32 %v210, %v211
      %v213 = vsub.f32 %v202, %v212
      %v214 = vmul.f32 %v213, %v213
      %v215 = vsel %vm203, %v214, 0.0
      %v216 = vrot.slane %v215, 4
      %v217 = vadd.f32 %v215, %v216
      %v218 = vrot.slane %v217, 2
      %v219 = vadd.f32 %v217, %v218
      %v220 = vrot.slane %v219, 1
      %v221 = vadd.f32 %v219, %v220
      %v222 = vmul.f32 %v221, %v211
      %v223 = vadd.f32 %v222, 1e-06
      %v224 = vrsqrt.pop %v223
      %v225 = vmul.f32 %v213, %v224
      %v226 = vld [vmem:[%s1] sm:$0xf]
      %228 = vset.pattern.permute.xlu0 0
      %229 = vperm.xlu0 %228, %v226
      %v230 = vpop.permute.xlu0 %229
      %v232 = vmul.f32 %v225, %v230
      %v233 = vld [vmem:[%s2] sm:$0xf]
      %235 = vset.pattern.permute.xlu0 0
      %236 = vperm.xlu0 %235, %v233
      %v237 = vpop.permute.xlu0 %236
      %v239 = vadd.f32 %v232, %v237
      %240 = vst [vmem:[%s201] sm:$0xf] %v239
      %p241 = scmp.lt.s32.totalorder %s18, 1
      %s242 = scalar_select %p241, %s18, 1
      %p243 = scmp.lt.s32.totalorder %s19, 1
      %s244 = scalar_select %p243, %s19, 1
      %s245 = smul.addr %s242, 2
      %s246 = sadd.s32 %s244, %s245
      %s247 = smul.addr %s246, 4
      %s248 = scalar_lea.vmem %s3, %s247
      // Predicated region
      $region33: #{_layer_norm.1} parent=31 // pred_check
        %p249 = pneg %p116
      $region34: #{_layer_norm.1} parent=31 // pred_check_branch
        %251 = sbr.rel (%p249) target = $region36
      $region35: #{_layer_norm.1} parent=31 // pred_region
        _
      $region36: #{_layer_norm.1} parent=31 // pred_fallthru
        _
    $region32: #{_layer_norm.1} parent=5 // pred_fallthru
      _
    %p252 = scmp.le.s32.totalorder 2, %s9
    // Predicated region
    $region37: #{_layer_norm.1} parent=5 // pred_check
      %p253 = pneg %p252
    $region38: #{_layer_norm.1} parent=5 // pred_check_branch
      %255 = sbr.rel (%p253) target = $region40
    $region39: #{_layer_norm.1} parent=5 // pred_region
      %s256 = ssub.s32 %s9, 2
      // Predicated region
      $region41: #{_layer_norm.1} parent=39 // pred_check
        %p257 = pneg %p122
      $region42: #{_layer_norm.1} parent=39 // pred_check_branch
        %259 = sbr.rel (%p257) target = $region44
      $region43: #{_layer_norm.1} parent=39 // pred_region
        %p260 = scmp.lt.s32.totalorder %s20, 1
        %s261 = scalar_select %p260, %s20, 1
        %p262 = scmp.lt.s32.totalorder %s21, 1
        %s263 = scalar_select %p262, %s21, 1
        %s264 = smul.addr %s261, 2
        %s265 = sadd.s32 %s263, %s264
        %s266 = smul.addr %s265, 4
        %s267 = scalar_lea.vmem %s3, %s266
      $region44: #{_layer_norm.1} parent=39 // pred_fallthru
        _
    $region40: #{_layer_norm.1} parent=5 // pred_fallthru
      _
  $region6: #{_layer_norm.1} parent=0 // loop_footer
    %s13 = sadd.s32 1, %s9
  $region7: #{_layer_norm.1} parent=0 // loop_footer_branch
    %8 = sbr.rel target = $region3
  $region8: #{_layer_norm.1} parent=0 // loop_exit
    _

</llo_original>
